<compile_context>
chip_gen: v5e
topology: v5e:2x2
jax: 0.10.0
libtpu: 0.0.40
codegen_flags: <defaults>
</compile_context>

<pallas_src>
import functools

import numpy as np
import jax
import jax.numpy as jnp
from jax.experimental import pallas as pl
from jax.experimental.pallas import tpu as pltpu


def _clip_bounds(bitwidth, signed):
    # Replicates RoundAndClipInt8/Int16/Uint8/Uint16 constants exactly
    # (note: the reference Uint16 clamps to [0, 65536], not 65535).
    if signed:
        return (-128.0, 127.0) if bitwidth == 8 else (-32768.0, 32767.0)
    return (0.0, 255.0) if bitwidth == 8 else (0.0, 65536.0)


# ----------------------------------------------------------------------------
# Kernel
# ----------------------------------------------------------------------------
def _quantize_kernel(x_ref, m_ref, inv_ref, o_ref, *, qmin, qmax):
    # Elementwise hot path (pure VALU): scale -> round (half-to-even, same as
    # torch.round) -> clamp -> unscale via multiply-by-inverse.
    x = x_ref[...].astype(jnp.float32)          # (TR, TC)
    m = m_ref[...]                              # (TR, 1) broadcasts over lanes
    inv_m = inv_ref[...]                        # (TR, 1)
    y = jnp.clip(jnp.round(x * m), qmin, qmax)
    o_ref[...] = (y * inv_m).astype(o_ref.dtype)


# ----------------------------------------------------------------------------
# Tiling helpers
# ----------------------------------------------------------------------------
_MAX_TILE_ELEMS = 512 * 1024  # 2 MiB per f32 tile; ~8-9 MiB live when double-buffered
_LANE_TILE = 2048             # lane-dense column tile (multiple of 128)


def _choose_tile(rows, cols):
    # Lane (last) dim: a large multiple of 128 when the array allows it,
    # otherwise it must equal the full extent (BlockSpec (8,128) rule).
    if cols % 128 == 0 and cols >= 128:
        tc = min(cols, _LANE_TILE)
    else:
        tc = cols
    # Sublane dim: multiple of 8 (or full extent), sized to the VMEM budget.
    if rows % 8 == 0 and rows >= 8:
        cap = max(8, (_MAX_TILE_ELEMS // max(tc, 1)) // 8 * 8)
        tr = min(rows, cap, 1024)
    else:
        tr = rows
    return tr, tc


def _flatten_lane_dense(x):
    """Lane-dense 2-D view of a flat array (scalar-frac case).

    Returns (x2, orig_size, padded). Prefers a zero-copy factorization whose
    row count is tileable; pads (one cheap extra pass) only for rare sizes
    that would otherwise force a single oversized block.
    """
    total = x.size
    flat = x.reshape(-1)
    for c in (2048, 1024, 512, 256, 128):
        if total % c == 0:
            rows = total // c
            if rows % 8 == 0 or rows <= 1024:
                return flat.reshape(rows, c), total, False
    # Fallback: pad so rows % 8 == 0 and cols == _LANE_TILE -> fully tileable.
    chunk = 8 * _LANE_TILE
    padded_total = ((total + chunk - 1) // chunk) * chunk
    flat = jnp.pad(flat, (0, padded_total - total))
    return flat.reshape(padded_total // _LANE_TILE, _LANE_TILE), total, True


# ----------------------------------------------------------------------------
# pallas_call runner on a 2-D (rows, cols) slab with per-row multiplier
# ----------------------------------------------------------------------------
def _run_kernel_2d(x2, m2, inv2, qmin, qmax):
    rows, cols = x2.shape
    tr, tc = _choose_tile(rows, cols)
    grid = (pl.cdiv(rows, tr), pl.cdiv(cols, tc))
    return pl.pallas_call(
        functools.partial(_quantize_kernel, qmin=qmin, qmax=qmax),
        out_shape=jax.ShapeDtypeStruct(x2.shape, x2.dtype),
        grid_spec=pltpu.PrefetchScalarGridSpec(
            num_scalar_prefetch=0,
            grid=grid,
            in_specs=[
                pl.BlockSpec((tr, tc), lambda i, j: (i, j)),
                pl.BlockSpec((tr, 1), lambda i, j: (i, 0)),
                pl.BlockSpec((tr, 1), lambda i, j: (i, 0)),
            ],
            out_specs=pl.BlockSpec((tr, tc), lambda i, j: (i, j)),
        ),
        compiler_params=pltpu.CompilerParams(
            # Independent tiles: shard both grid axes across cores (v7x 2 TCs);
            # near-neutral but harmless on v5e/v6e.
            dimension_semantics=("parallel", "parallel"),
            vmem_limit_bytes=32 * 1024 * 1024,
        ),
        # NOTE: no input_output_aliases -- x2 may be a bitcast view of the
        # caller's tensor, and aliasing would make the fake-quant destructive.
    )(x2, m2, inv2)


# ----------------------------------------------------------------------------
# Public wrapper (QuantizeParam.forward equivalent)
# ----------------------------------------------------------------------------
def quantize_param(x, frac, *, bitwidth=8, signed=True, type=0):
    """JAX/Pallas equivalent of QuantizeParam.forward.

    x    : float array (layout per `type`, see module docstring)
    frac : per-channel exponent array (type 0/2) or scalar (type 1)
    """
    assert bitwidth in (8, 16)
    x = jnp.asarray(x)
    if not jnp.issubdtype(x.dtype, jnp.floating):
        x = x.astype(jnp.float32)
    frac = jnp.asarray(frac, jnp.float32)
    qmin, qmax = _clip_bounds(bitwidth, signed)

    # Per-channel multiplier and its reciprocal (tiny wrapper-side compute).
    # NOTE: the PyTorch reference keeps frac_multiplier in float64; float32 is
    # exact for power-of-two multipliers (integer frac).
    m = jnp.exp2(frac).astype(jnp.float32)
    inv_m = (1.0 / m).astype(jnp.float32)  # exact for powers of two

    if type == 0:
        # Conv weight (Cout, Cin, kH, kW) with per-Cout frac -> rows = Cout.
        c = x.shape[0]
        x2 = x.reshape(c, -1)
        out2 = _run_kernel_2d(x2, m.reshape(c, 1), inv_m.reshape(c, 1), qmin, qmax)
        # When Cin*kH*kW is a multiple of 128 the stores are fully lane-dense;
        # for small weights (< 128 cols) the full-extent fallback is used.
        return out2.reshape(x.shape)
    elif type == 1:
        # Scalar frac applied elementwise.
        # TODO(synk): general (non-scalar) numpy-style broadcasting for type=1
        # is not implemented; only the scalar case is supported here.
        assert frac.size == 1, "type=1 supported for scalar frac only"
        x2, total, padded = _flatten_lane_dense(x)
        rows = x2.shape[0]
        m2 = jnp.broadcast_to(m.reshape(1, 1), (rows, 1))
        inv2 = jnp.broadcast_to(inv_m.reshape(1, 1), (rows, 1))
        out2 = _run_kernel_2d(x2, m2, inv2, qmin, qmax)
        out_flat = out2.reshape(-1)
        if padded:
            out_flat = out_flat[:total]
        return out_flat.reshape(x.shape)
    elif type == 2:
        # NCHW activation with per-C frac: rows = N*C, cols = H*W.
        # No transposes: frac is tiled per-N wrapper-side (tiny), saving the
        # two full HBM repack passes a channel-major layout would need.
        n, ch, h, w = x.shape
        x2 = x.reshape(n * ch, h * w)
        m2 = jnp.tile(m, n).reshape(n * ch, 1)
        inv2 = jnp.tile(inv_m, n).reshape(n * ch, 1)
        out2 = _run_kernel_2d(x2, m2, inv2, qmin, qmax)
        return out2.reshape(x.shape)
    else:
        raise ValueError(f"wrong type : {type}")


# ----------------------------------------------------------------------------
# Pure-numpy reference matching the PyTorch forward
# ----------------------------------------------------------------------------
def _reference(x, frac, bitwidth, signed, type):
    x = np.asarray(x, np.float32)
    m = np.power(2.0, np.asarray(frac, np.float32)).astype(np.float32)
    if type == 0:
        m = m[..., None, None, None]
    elif type == 2:
        m = m[None, ..., None, None]
    qmin, qmax = _clip_bounds(bitwidth, signed)
    y = x * m
    y = np.clip(np.round(y), qmin, qmax)  # np.round is half-to-even like torch.round
    return (y / m).astype(np.float32)


if __name__ == "__main__":
    key = jax.random.PRNGKey(0)
    k0, k1, k2, k3, k4 = jax.random.split(key, 5)

    # --- type=0: quantize a conv weight (Cout, Cin, kH, kW) with per-Cout frac ---
    w = jax.random.normal(k0, (8, 4, 3, 3), dtype=jnp.float32) * 2.0
    frac_w = jnp.asarray(jax.random.randint(k1, (8,), 2, 7), jnp.float32)
    out_w = jax.block_until_ready(quantize_param(w, frac_w, bitwidth=8, signed=True, type=0))
    ref_w = _reference(np.asarray(w), np.asarray(frac_w), 8, True, 0)
    np.testing.assert_allclose(np.asarray(out_w), ref_w, rtol=1e-6, atol=1e-6)

    # --- type=2: quantize an NCHW activation with per-channel frac ---
    x = jax.random.normal(k2, (2, 4, 16, 16), dtype=jnp.float32) * 4.0
    frac_x = jnp.asarray(jax.random.randint(k3, (4,), 2, 7), jnp.float32)
    out_x = jax.block_until_ready(quantize_param(x, frac_x, bitwidth=16, signed=True, type=2))
    ref_x = _reference(np.asarray(x), np.asarray(frac_x), 16, True, 2)
    np.testing.assert_allclose(np.asarray(out_x), ref_x, rtol=1e-6, atol=1e-6)

    # --- type=1: scalar frac, unsigned 8-bit ---
    y = jax.random.normal(k4, (2, 4, 16, 16), dtype=jnp.float32) * 4.0
    frac_y = jnp.asarray(5.0, jnp.float32)
    out_y = jax.block_until_ready(quantize_param(y, frac_y, bitwidth=8, signed=False, type=1))
    ref_y = _reference(np.asarray(y), np.asarray(frac_y), 8, False, 1)
    np.testing.assert_allclose(np.asarray(out_y), ref_y, rtol=1e-6, atol=1e-6)

    # --- type=1: odd flat size exercising the padded lane-dense fallback ---
    z = jax.random.normal(k4, (3, 5, 7, 11), dtype=jnp.float32) * 4.0
    out_z = jax.block_until_ready(quantize_param(z, frac_y, bitwidth=8, signed=True, type=1))
    ref_z = _reference(np.asarray(z), np.asarray(frac_y), 8, True, 1)
    np.testing.assert_allclose(np.asarray(out_z), ref_z, rtol=1e-6, atol=1e-6)

    print("KERNEL_OK")
</pallas_src>

<mosaic_0001>
module attributes {stable_mosaic.version = 11 : i64} {
  func.func @_quantize_kernel(%arg0: i32, %arg1: i32, %arg2: memref<8x36xf32, #tpu.memory_space<vmem>>, %arg3: memref<8x1xf32, #tpu.memory_space<vmem>>, %arg4: memref<8x1xf32, #tpu.memory_space<vmem>>, %arg5: memref<8x36xf32, #tpu.memory_space<vmem>>) attributes {dimension_semantics = [#tpu.dimension_semantics<parallel>, #tpu.dimension_semantics<parallel>], iteration_bounds = array<i64: 1, 1>, scalar_prefetch = 0 : i64, scratch_operands = 0 : i64, tpu.core_type = #tpu.core_type<tc>, window_params = [{transform_indices = @transform_0, window_bounds = array<i64: 8, 36>}, {transform_indices = @transform_1, window_bounds = array<i64: 8, 1>}, {transform_indices = @transform_2, window_bounds = array<i64: 8, 1>}, {transform_indices = @transform_3, window_bounds = array<i64: 8, 36>}]} {
    %c0 = arith.constant 0 : index
    %c0_0 = arith.constant 0 : index
    %0 = vector.load %arg2[%c0, %c0_0] : memref<8x36xf32, #tpu.memory_space<vmem>>, vector<8x36xf32>
    %c0_1 = arith.constant 0 : index
    %c0_2 = arith.constant 0 : index
    %1 = vector.load %arg3[%c0_1, %c0_2] : memref<8x1xf32, #tpu.memory_space<vmem>>, vector<8x1xf32>
    %c0_3 = arith.constant 0 : index
    %c0_4 = arith.constant 0 : index
    %2 = vector.load %arg4[%c0_3, %c0_4] : memref<8x1xf32, #tpu.memory_space<vmem>>, vector<8x1xf32>
    %3 = vector.broadcast %1 : vector<8x1xf32> to vector<8x36xf32>
    %4 = arith.mulf %0, %3 : vector<8x36xf32>
    %5 = math.roundeven %4 : vector<8x36xf32>
    %cst = arith.constant -1.280000e+02 : f32
    %cst_5 = arith.constant 1.270000e+02 : f32
    %6 = vector.broadcast %cst : f32 to vector<8x36xf32>
    %7 = arith.maximumf %6, %5 : vector<8x36xf32>
    %8 = vector.broadcast %cst_5 : f32 to vector<8x36xf32>
    %9 = arith.minimumf %8, %7 : vector<8x36xf32>
    %10 = vector.broadcast %2 : vector<8x1xf32> to vector<8x36xf32>
    %11 = arith.mulf %9, %10 : vector<8x36xf32>
    %c0_6 = arith.constant 0 : index
    %c0_7 = arith.constant 0 : index
    %12 = vector.load %arg5[%c0_6, %c0_7] : memref<8x36xf32, #tpu.memory_space<vmem>>, vector<8x36xf32>
    tpu.vector_store %arg5[%c0_6, %c0_7], %11 {strides = array<i32>} : memref<8x36xf32, #tpu.memory_space<vmem>>, vector<8x36xf32>,
    return
  }
  func.func @transform_0(%arg0: i32, %arg1: i32) -> (i32, i32) {
    %c0_i32 = arith.constant 0 : i32
    return %arg0, %arg1 : i32, i32
  }
  func.func @transform_1(%arg0: i32, %arg1: i32) -> (i32, i32) {
    %c0_i32 = arith.constant 0 : i32
    %c0_i32_0 = arith.constant 0 : i32
    return %arg0, %c0_i32 : i32, i32
  }
  func.func @transform_2(%arg0: i32, %arg1: i32) -> (i32, i32) {
    %c0_i32 = arith.constant 0 : i32
    %c0_i32_0 = arith.constant 0 : i32
    return %arg0, %c0_i32 : i32, i32
  }
  func.func @transform_3(%arg0: i32, %arg1: i32) -> (i32, i32) {
    %c0_i32 = arith.constant 0 : i32
    return %arg0, %arg1 : i32, i32
  }
}

</mosaic_0001>

<llo_original>
// kernel: tpu_custom_call.1
$region0: #{tpu_custom_call.1}
  #allocation0 [shape = 'u32[]', space=smem, size = 0x4, offset = 0x4, fixed_abs, tag = 'smem constant byte address 0x4 - core index']
  #allocation1 [shape = 'u32[72,128]{1,0:T(1,128)}', space=vmem, size = 0x9000, scoped, tag = 'internal scratch']
  %s0 = inlined_call_operand.vmem [shape: f32[8,36], index: 0, kind: input, shape index: {}]
  %s1 = inlined_call_operand.vmem [shape: f32[8,1], index: 1, kind: input, shape index: {}]
  %s2 = inlined_call_operand.vmem [shape: f32[8,1], index: 2, kind: input, shape index: {}]
  %s3 = inlined_call_operand.hbm [shape: f32[8,36], index: 3, kind: output, shape index: {}]
  %s4 = sld [smem:[#allocation0]]
  $region22: #{tpu_custom_call.1} parent=0
    _
  %s6 = ssub.s32 1, %s4
  %s7 = scalar_select 0, %s6, %s4
  $region1: #{tpu_custom_call.1} parent=0
    #allocation2 [shape = 'u8[4096]{0}', space=vmem, size = 0x1000, scoped, tag = 'output window, operand 0, single buffered']
    #allocation3 [shape = 's32[1]{0}', space=sflag, size = 0x4, scoped, tag = 'scoped memory for tpu_custom_call.1']
    %8 = vsyncpa [#allocation3], 0
    // Predicated region
    $region2: #{tpu_custom_call.1} parent=1 // pred_check
      _
    $region3: #{tpu_custom_call.1} parent=1 // pred_check_branch
      %10 = sbr.rel (0) target = $region5
    $region4: #{tpu_custom_call.1} parent=1 // pred_region
      _
    $region5: #{tpu_custom_call.1} parent=1 // pred_fallthru
      _
    // Predicated region
    $region6: #{tpu_custom_call.1} parent=1 // pred_check
      _
    $region7: #{tpu_custom_call.1} parent=1 // pred_check_branch
      %12 = sbr.rel (0) target = $region9
    $region8: #{tpu_custom_call.1} parent=1 // pred_region
      _
    $region9: #{tpu_custom_call.1} parent=1 // pred_fallthru
      _
    // Predicated region
    $region10: #{tpu_custom_call.1} parent=1 // pred_check
      _
    $region11: #{tpu_custom_call.1} parent=1 // pred_check_branch
      %14 = sbr.rel (0) target = $region13
    $region12: #{tpu_custom_call.1} parent=1 // pred_region
      _
    $region13: #{tpu_custom_call.1} parent=1 // pred_fallthru
      _
    %v15 = vld [vmem:[%s0] sm:$0xff]
    %v16 = vld [vmem:[%s1] sm:$0xff]
    %v17 = vld [vmem:[%s2] sm:$0xff]
    %19 = vset.pattern.permute.xlu0 0
    %20 = vperm.xlu0 %19, %v16
    %v21 = vpop.permute.xlu0 %20
    %v23 = vmul.f32 %v15, %v21
    %v24 = vround.ne.pseudo %v23
    %v25 = vmax.f32 %v24, -128.0
    %v26 = vmin.f32 %v25, 127.0
    %28 = vset.pattern.permute.xlu0 0
    %29 = vperm.xlu0 %28, %v17
    %v30 = vpop.permute.xlu0 %29
    %v32 = vmul.f32 %v26, %v30
    %vm33 = vcmask 293888
    %34 = vst.msk [vmem:[#allocation2] sm:$0xff] %vm33, %v32
    // Predicated region
    $region14: #{tpu_custom_call.1} parent=1 // pred_check
      _
    $region15: #{tpu_custom_call.1} parent=1 // pred_check_branch
      %36 = sbr.rel (0) target = $region17
    $region16: #{tpu_custom_call.1} parent=1 // pred_region
      %38 = vsyncadd [#allocation3], 0
      %s40 = sshll.u32 [#allocation2], 4
      %s41 = int_to_ptr.vmem [resolvable:$true] %s40
      %s42 = sshll.u32 %s3, 4
      %s43 = int_to_ptr.hbm [resolvable:$true] %s42
      %45 = dma.vmem_to_hbm [thread:$0]  %s41, 128, %s43, [#allocation3]
    $region17: #{tpu_custom_call.1} parent=1 // pred_fallthru
      _
    // Predicated region
    $region18: #{tpu_custom_call.1} parent=1 // pred_check
      _
    $region19: #{tpu_custom_call.1} parent=1 // pred_check_branch
      %47 = sbr.rel (0) target = $region21
    $region20: #{tpu_custom_call.1} parent=1 // pred_region
      %49 = dma.done [#allocation3], 128
    $region21: #{tpu_custom_call.1} parent=1 // pred_fallthru
      _
    %50 = vsyncpa [#allocation3], 1

</llo_original>
